<compile_context>
chip_gen: v6e
topology: v6e:2x2x1
jax: 0.10.0
libtpu: 0.0.40
codegen_flags: <defaults>
</compile_context>

<pallas_src>
import functools

import jax
import jax.numpy as jnp
from jax import lax
from jax.experimental import pallas as pl
from jax.experimental.pallas import tpu as pltpu


def _round_up(v, m):
    return ((v + m - 1) // m) * m


def _domain_loss_kernel(x_ref, y_ref, w1_ref, b1_ref, w2_ref, b2_ref,
                        loss_ref, acc_ref, *, nvalid):
    # x: (tb, C) f32          y: (1, tb) f32 (lane-dense labels)
    # w1: (C, H) bf16          b1: (H, 1) f32       w2: (1, H) bf16      b2: SMEM (1,) f32
    # loss/acc out: (1, 1, 128) f32 lane-dense per-tile partial sums
    i = pl.program_id(0)
    tb = x_ref.shape[0]

    # Cast the streamed f32 tile to bf16 on the VPU right before the MXU.
    x_bf = x_ref[...].astype(jnp.bfloat16)                        # (tb, C)

    # Layer 1, transposed: h[f, n] = sum_c w1[c, f] * x[n, c]  -> (H, tb), f32 accumulation.
    h = lax.dot_general(w1_ref[...], x_bf,
                        dimension_numbers=(((0,), (1,)), ((), ())),
                        preferred_element_type=jnp.float32)        # (H, tb)
    h = jnp.maximum(h + b1_ref[...], 0.0)                          # bias broadcasts over lanes

    # Layer 2: (1, H) @ (H, tb) -> lane-dense logits row (1, tb), f32 accumulation.
    z = jnp.dot(w2_ref[...], h.astype(jnp.bfloat16),
                preferred_element_type=jnp.float32) + b2_ref[0]    # (1, tb)

    # Mask the (possibly ragged) last batch tile; OOB lanes hold garbage.
    col = lax.broadcasted_iota(jnp.int32, (1, tb), 1) + i * tb
    valid = col < nvalid
    valid_f = valid.astype(jnp.float32)
    z = jnp.where(valid, z, 0.0)
    y = jnp.where(valid, y_ref[...], 0.0)

    # Numerically stable binary_cross_entropy_with_logits + accuracy, masked:
    #   l = max(z, 0) - z*y + log(1 + exp(-|z|))
    per = (jnp.maximum(z, 0.0) - z * y + jnp.log1p(jnp.exp(-jnp.abs(z)))) * valid_f
    pred = (z >= 0.0).astype(jnp.float32)
    correct = (pred == y).astype(jnp.float32) * valid_f

    # Lane-preserving partial reduction (VPU adds only; no cross-lane XLU reduce in the body).
    # Final 128-lane sum and the 1/B scaling happen in the wrapper.
    r = tb // 128
    loss_ref[...] = jnp.sum(per.reshape(r, 128), axis=0).reshape(1, 1, 128)
    acc_ref[...] = jnp.sum(correct.reshape(r, 128), axis=0).reshape(1, 1, 128)


@functools.partial(jax.jit, static_argnames=("tile_b",))
def binary_domain_loss(x, labels, w1, b1, w2, b2, *, tile_b=None):
    """Forward pass of BinaryDomainLossModule. Returns (loss, acc), both f32 scalars."""
    B, C = x.shape
    H = w1.shape[1]

    # Batch tile: multiple of 256, no larger than the rounded-up batch, capped at 8192.
    tb = 4096 if tile_b is None else int(tile_b)
    tb = min(tb, _round_up(B, 256), 8192)
    tb = max(256, _round_up(tb, 256))
    grid_b = pl.cdiv(B, tb)

    x32 = x.astype(jnp.float32)                        # stream f32; bf16 cast happens on-chip
    y_row = labels.astype(jnp.float32).reshape(1, B)   # lane-dense labels row
    w1_bf = w1.astype(jnp.bfloat16)                    # (C, H), tiny, VMEM-resident
    b1_col = b1.astype(jnp.float32).reshape(H, 1)
    w2_bf = w2.astype(jnp.bfloat16).reshape(1, H)
    b2_s = b2.astype(jnp.float32).reshape(1)

    kernel = functools.partial(_domain_loss_kernel, nvalid=B)

    loss_parts, acc_parts = pl.pallas_call(
        kernel,
        out_shape=(jax.ShapeDtypeStruct((grid_b, 1, 128), jnp.float32),
                   jax.ShapeDtypeStruct((grid_b, 1, 128), jnp.float32)),
        grid=(grid_b,),
        in_specs=[
            pl.BlockSpec((tb, C), lambda i: (i, 0)),            # x: batch-tiled, pipelined
            pl.BlockSpec((1, tb), lambda i: (0, i)),            # labels: lane-dense tile
            pl.BlockSpec((C, H), lambda i: (0, 0)),             # w1: VMEM-resident
            pl.BlockSpec((H, 1), lambda i: (0, 0)),             # b1: VMEM-resident
            pl.BlockSpec((1, H), lambda i: (0, 0)),             # w2: VMEM-resident
            pl.BlockSpec(memory_space=pltpu.MemorySpace.SMEM),  # b2 scalar
        ],
        out_specs=(
            pl.BlockSpec((1, 1, 128), lambda i: (i, 0, 0)),     # per-tile loss partials
            pl.BlockSpec((1, 1, 128), lambda i: (i, 0, 0)),     # per-tile correct-count partials
        ),
        compiler_params=pltpu.CompilerParams(
            dimension_semantics=("parallel",),
            vmem_limit_bytes=32 * 1024 * 1024),
    )(x32, y_row, w1_bf, b1_col, w2_bf, b2_s)

    inv_n = jnp.float32(1.0 / B)
    loss = jnp.sum(loss_parts) * inv_n
    acc = jnp.sum(acc_parts) * inv_n
    return loss, acc


def _reference(x, labels, w1, b1, w2, b2):
    """Pure-JAX reference matching the PyTorch forward (same bf16 MXU feed as the kernel)."""
    h = jnp.dot(x.astype(jnp.bfloat16), w1.astype(jnp.bfloat16),
                preferred_element_type=jnp.float32) + b1
    h = jnp.maximum(h, 0.0)
    z = jnp.dot(h.astype(jnp.bfloat16), w2.astype(jnp.bfloat16).reshape(-1, 1),
                preferred_element_type=jnp.float32)[:, 0] + b2[0]
    y = labels.astype(jnp.float32)
    per = jnp.maximum(z, 0.0) - z * y + jnp.log1p(jnp.exp(-jnp.abs(z)))
    loss = jnp.mean(per)
    pred = (z >= 0.0).astype(jnp.float32)
    acc = jnp.mean((pred == y).astype(jnp.float32))
    return loss, acc


if __name__ == "__main__":
    # Small shapes: batch=600 forces a multi-tile grid (3 tiles of 256) with a ragged last
    # tile (88 valid rows) when tile_b=256; in_chans=32, hidden_chans=256 (module default).
    B, C, H = 600, 32, 256

    key = jax.random.PRNGKey(0)
    kx, kl, kw1, kb1, kw2, kb2 = jax.random.split(key, 6)

    x = jax.random.normal(kx, (B, C), dtype=jnp.float32)
    labels = jax.random.bernoulli(kl, 0.5, (B,)).astype(jnp.float32)

    # Deterministic parameter init (uniform, roughly matching nn.Linear's scale).
    lim1 = 1.0 / jnp.sqrt(C)
    lim2 = 1.0 / jnp.sqrt(H)
    w1 = jax.random.uniform(kw1, (C, H), minval=-lim1, maxval=lim1, dtype=jnp.float32)
    b1 = jax.random.uniform(kb1, (H,), minval=-lim1, maxval=lim1, dtype=jnp.float32)
    w2 = jax.random.uniform(kw2, (H,), minval=-lim2, maxval=lim2, dtype=jnp.float32)
    b2 = jax.random.uniform(kb2, (1,), minval=-lim2, maxval=lim2, dtype=jnp.float32)

    ref_loss, ref_acc = _reference(x, labels, w1, b1, w2, b2)

    # Multi-tile + ragged-last-tile path.
    loss, acc = binary_domain_loss(x, labels, w1, b1, w2, b2, tile_b=256)
    loss, acc = jax.block_until_ready((loss, acc))
    assert jnp.allclose(loss, ref_loss, atol=1e-3, rtol=1e-3), (loss, ref_loss)
    assert jnp.allclose(acc, ref_acc, atol=1e-6), (acc, ref_acc)

    # Default (auto) tile size: single masked tile covering the whole batch.
    loss_d, acc_d = binary_domain_loss(x, labels, w1, b1, w2, b2)
    loss_d, acc_d = jax.block_until_ready((loss_d, acc_d))
    assert jnp.allclose(loss_d, ref_loss, atol=1e-3, rtol=1e-3), (loss_d, ref_loss)
    assert jnp.allclose(acc_d, ref_acc, atol=1e-6), (acc_d, ref_acc)

    print("KERNEL_OK")
</pallas_src>

<mosaic_0001>
module attributes {stable_mosaic.version = 11 : i64} {
  func.func @_domain_loss_kernel(%arg0: i32, %arg1: memref<256x32xf32, #tpu.memory_space<vmem>>, %arg2: memref<1x256xf32, #tpu.memory_space<vmem>>, %arg3: memref<32x256xbf16, #tpu.memory_space<vmem>>, %arg4: memref<256x1xf32, #tpu.memory_space<vmem>>, %arg5: memref<1x256xbf16, #tpu.memory_space<vmem>>, %arg6: memref<1xf32, #tpu.memory_space<smem>>, %arg7: memref<1x1x128xf32, #tpu.memory_space<vmem>>, %arg8: memref<1x1x128xf32, #tpu.memory_space<vmem>>) attributes {dimension_semantics = [#tpu.dimension_semantics<parallel>], iteration_bounds = array<i64: 3>, scalar_prefetch = 0 : i64, scratch_operands = 0 : i64, tpu.core_type = #tpu.core_type<tc>, window_params = [{transform_indices = @transform_0, window_bounds = array<i64: 256, 32>}, {transform_indices = @transform_1, window_bounds = array<i64: 1, 256>}, {pipeline_mode = #tpu.pipeline_mode<synchronous>, transform_indices = @transform_2, window_bounds = array<i64: 32, 256>}, {pipeline_mode = #tpu.pipeline_mode<synchronous>, transform_indices = @transform_3, window_bounds = array<i64: 256, 1>}, {pipeline_mode = #tpu.pipeline_mode<synchronous>, transform_indices = @transform_4, window_bounds = array<i64: 1, 256>}, {transform_indices = @transform_5, window_bounds = array<i64: 1>}, {transform_indices = @transform_6, window_bounds = array<i64: 1, 1, 128>}, {transform_indices = @transform_7, window_bounds = array<i64: 1, 1, 128>}]} {
    %c0 = arith.constant 0 : index
    %c0_0 = arith.constant 0 : index
    %0 = vector.load %arg1[%c0, %c0_0] : memref<256x32xf32, #tpu.memory_space<vmem>>, vector<256x32xf32>
    %1 = arith.truncf %0 : vector<256x32xf32> to vector<256x32xbf16>
    %c0_1 = arith.constant 0 : index
    %c0_2 = arith.constant 0 : index
    %2 = vector.load %arg3[%c0_1, %c0_2] : memref<32x256xbf16, #tpu.memory_space<vmem>>, vector<32x256xbf16>
    %cst = arith.constant dense<0.000000e+00> : vector<256x256xf32>
    %3 = tpu.matmul %2, %1, %cst {dimension_numbers = #tpu.dot_dimension_numbers<[0], [1], [1], [0], [0, 1, 1, 0], [], []>} : vector<32x256xbf16>, vector<256x32xbf16>, vector<256x256xf32> -> vector<256x256xf32>
    %c0_3 = arith.constant 0 : index
    %c0_4 = arith.constant 0 : index
    %4 = vector.load %arg4[%c0_3, %c0_4] : memref<256x1xf32, #tpu.memory_space<vmem>>, vector<256x1xf32>
    %5 = vector.broadcast %4 : vector<256x1xf32> to vector<256x256xf32>
    %6 = arith.addf %3, %5 : vector<256x256xf32>
    %cst_5 = arith.constant 0.000000e+00 : f32
    %7 = vector.broadcast %cst_5 : f32 to vector<256x256xf32>
    %8 = arith.maximumf %6, %7 : vector<256x256xf32>
    %c0_6 = arith.constant 0 : index
    %c0_7 = arith.constant 0 : index
    %9 = vector.load %arg5[%c0_6, %c0_7] : memref<1x256xbf16, #tpu.memory_space<vmem>>, vector<1x256xbf16>
    %10 = arith.truncf %8 : vector<256x256xf32> to vector<256x256xbf16>
    %cst_8 = arith.constant dense<0.000000e+00> : vector<1x256xf32>
    %11 = tpu.matmul %9, %10, %cst_8 {dimension_numbers = #tpu.dot_dimension_numbers<[1], [0], [0], [1], [0, 0, 1, 1], [], []>} : vector<1x256xbf16>, vector<256x256xbf16>, vector<1x256xf32> -> vector<1x256xf32>
    %c0_9 = arith.constant 0 : index
    %12 = memref.load %arg6[%c0_9] : memref<1xf32, #tpu.memory_space<smem>>
    %13 = vector.broadcast %12 : f32 to vector<1x256xf32>
    %14 = arith.addf %11, %13 : vector<1x256xf32>
    %15 = tpu.iota {dimensions = array<i32: 1>} : vector<1x256xi32>
    %c256_i32 = arith.constant 256 : i32
    %16 = arith.muli %arg0, %c256_i32 : i32
    %17 = vector.broadcast %16 : i32 to vector<1x256xi32>
    %18 = arith.addi %15, %17 : vector<1x256xi32>
    %c600_i32 = arith.constant 600 : i32
    %19 = vector.broadcast %c600_i32 : i32 to vector<1x256xi32>
    %20 = arith.cmpi slt, %18, %19 : vector<1x256xi32>
    %21 = arith.extui %20 : vector<1x256xi1> to vector<1x256xi32>
    %22 = arith.sitofp %21 : vector<1x256xi32> to vector<1x256xf32>
    %cst_10 = arith.constant 0.000000e+00 : f32
    %23 = vector.broadcast %cst_10 : f32 to vector<1x256xf32>
    %24 = arith.select %20, %14, %23 : vector<1x256xi1>, vector<1x256xf32>
    %c0_11 = arith.constant 0 : index
    %c0_12 = arith.constant 0 : index
    %25 = vector.load %arg2[%c0_11, %c0_12] : memref<1x256xf32, #tpu.memory_space<vmem>>, vector<1x256xf32>
    %cst_13 = arith.constant 0.000000e+00 : f32
    %26 = vector.broadcast %cst_13 : f32 to vector<1x256xf32>
    %27 = arith.select %20, %25, %26 : vector<1x256xi1>, vector<1x256xf32>
    %cst_14 = arith.constant 0.000000e+00 : f32
    %28 = vector.broadcast %cst_14 : f32 to vector<1x256xf32>
    %29 = arith.maximumf %24, %28 : vector<1x256xf32>
    %30 = arith.mulf %24, %27 : vector<1x256xf32>
    %31 = arith.subf %29, %30 : vector<1x256xf32>
    %32 = math.absf %24 : vector<1x256xf32>
    %cst_15 = arith.constant 0.000000e+00 : f32
    %33 = vector.broadcast %cst_15 : f32 to vector<1x256xf32>
    %34 = arith.subf %33, %32 : vector<1x256xf32>
    %35 = math.exp %34 : vector<1x256xf32>
    %36 = math.log1p %35 : vector<1x256xf32>
    %37 = arith.addf %31, %36 : vector<1x256xf32>
    %38 = arith.mulf %37, %22 : vector<1x256xf32>
    %cst_16 = arith.constant 0.000000e+00 : f32
    %39 = vector.broadcast %cst_16 : f32 to vector<1x256xf32>
    %40 = arith.cmpf oge, %24, %39 : vector<1x256xf32>
    %41 = arith.extui %40 : vector<1x256xi1> to vector<1x256xi32>
    %42 = arith.sitofp %41 : vector<1x256xi32> to vector<1x256xf32>
    %43 = arith.cmpf oeq, %42, %27 : vector<1x256xf32>
    %44 = arith.extui %43 : vector<1x256xi1> to vector<1x256xi32>
    %45 = arith.sitofp %44 : vector<1x256xi32> to vector<1x256xf32>
    %46 = arith.mulf %45, %22 : vector<1x256xf32>
    %47 = vector.shape_cast %38 : vector<1x256xf32> to vector<2x128xf32>
    %cst_17 = arith.constant dense<0.000000e+00> : vector<128xf32>
    %48 = vector.multi_reduction <add>, %47, %cst_17 [0] : vector<2x128xf32> to vector<128xf32>
    %49 = vector.shape_cast %48 : vector<128xf32> to vector<1x1x128xf32>
    %c0_18 = arith.constant 0 : index
    %c0_19 = arith.constant 0 : index
    %c0_20 = arith.constant 0 : index
    %50 = vector.load %arg7[%c0_18, %c0_19, %c0_20] : memref<1x1x128xf32, #tpu.memory_space<vmem>>, vector<1x1x128xf32>
    tpu.vector_store %arg7[%c0_18, %c0_19, %c0_20], %49 {strides = array<i32>} : memref<1x1x128xf32, #tpu.memory_space<vmem>>, vector<1x1x128xf32>,
    %51 = vector.shape_cast %46 : vector<1x256xf32> to vector<2x128xf32>
    %cst_21 = arith.constant dense<0.000000e+00> : vector<128xf32>
    %52 = vector.multi_reduction <add>, %51, %cst_21 [0] : vector<2x128xf32> to vector<128xf32>
    %53 = vector.shape_cast %52 : vector<128xf32> to vector<1x1x128xf32>
    %c0_22 = arith.constant 0 : index
    %c0_23 = arith.constant 0 : index
    %c0_24 = arith.constant 0 : index
    %54 = vector.load %arg8[%c0_22, %c0_23, %c0_24] : memref<1x1x128xf32, #tpu.memory_space<vmem>>, vector<1x1x128xf32>
    tpu.vector_store %arg8[%c0_22, %c0_23, %c0_24], %53 {strides = array<i32>} : memref<1x1x128xf32, #tpu.memory_space<vmem>>, vector<1x1x128xf32>,
    return
  }
  func.func @transform_0(%arg0: i32) -> (i32, i32) {
    %c0_i32 = arith.constant 0 : i32
    %c0_i32_0 = arith.constant 0 : i32
    return %arg0, %c0_i32 : i32, i32
  }
  func.func @transform_1(%arg0: i32) -> (i32, i32) {
    %c0_i32 = arith.constant 0 : i32
    %c0_i32_0 = arith.constant 0 : i32
    return %c0_i32, %arg0 : i32, i32
  }
  func.func @transform_2(%arg0: i32) -> (i32, i32) {
    %c0_i32 = arith.constant 0 : i32
    %c0_i32_0 = arith.constant 0 : i32
    %c0_i32_1 = arith.constant 0 : i32
    return %c0_i32, %c0_i32_0 : i32, i32
  }
  func.func @transform_3(%arg0: i32) -> (i32, i32) {
    %c0_i32 = arith.constant 0 : i32
    %c0_i32_0 = arith.constant 0 : i32
    %c0_i32_1 = arith.constant 0 : i32
    return %c0_i32, %c0_i32_0 : i32, i32
  }
  func.func @transform_4(%arg0: i32) -> (i32, i32) {
    %c0_i32 = arith.constant 0 : i32
    %c0_i32_0 = arith.constant 0 : i32
    %c0_i32_1 = arith.constant 0 : i32
    return %c0_i32, %c0_i32_0 : i32, i32
  }
  func.func @transform_5(%arg0: i32) -> i32 {
    %c0_i32 = arith.constant 0 : i32
    %c0_i32_0 = arith.constant 0 : i32
    return %c0_i32 : i32
  }
  func.func @transform_6(%arg0: i32) -> (i32, i32, i32) {
    %c0_i32 = arith.constant 0 : i32
    %c0_i32_0 = arith.constant 0 : i32
    %c0_i32_1 = arith.constant 0 : i32
    return %arg0, %c0_i32, %c0_i32_0 : i32, i32, i32
  }
  func.func @transform_7(%arg0: i32) -> (i32, i32, i32) {
    %c0_i32 = arith.constant 0 : i32
    %c0_i32_0 = arith.constant 0 : i32
    %c0_i32_1 = arith.constant 0 : i32
    return %arg0, %c0_i32, %c0_i32_0 : i32, i32, i32
  }
}

</mosaic_0001>

<llo_original>
// kernel: binary_domain_loss.1
$region0: #{binary_domain_loss.1}
  #allocation0 [shape = 'u32[]', space=smem, size = 0x4, offset = 0x4, fixed_abs, tag = 'smem constant byte address 0x4 - core index']
  #allocation1 [shape = 'u32[144,128]{1,0:T(1,128)}', space=vmem, size = 0x12000, scoped, tag = 'internal scratch']
  #allocation2 [shape = 'f32[1]{0:T(128)S(6)}', space=smem, size = 0x200, scoped, tag = 'scoped memory for binary_domain_loss.1']
  %s0 = inlined_call_operand.vmem [shape: f32[600,32], index: 0, kind: input, shape index: {}]
  %s1 = inlined_call_operand.vmem [shape: f32[1,600], index: 1, kind: input, shape index: {}]
  %s2 = inlined_call_operand.vmem [shape: bf16[32,256], index: 2, kind: input, shape index: {}]
  %s3 = inlined_call_operand.vmem [shape: f32[256,1], index: 3, kind: input, shape index: {}]
  %s4 = inlined_call_operand.vmem [shape: bf16[1,256], index: 4, kind: input, shape index: {}]
  %s5 = inlined_call_operand.<no memory space> [shape: f32[1], index: 5, kind: input, shape index: {}]
  %s6 = inlined_call_operand.vmem [shape: f32[3,1,128], index: 6, kind: output, shape index: {0}]
  %s7 = inlined_call_operand.vmem [shape: f32[3,1,128], index: 7, kind: output, shape index: {1}]
  %8 = xla_tuple %s6, %s7
  %s9 = sld [smem:[#allocation0]]
  $region65: #{binary_domain_loss.1} parent=0
    _
  %s11 = ssub.s32 1, %s9
  %s12 = scalar_select 0, %s11, %s9
  %13 = sst [smem:[#allocation2]] %s5
  loop: start=0, step=1, limit=5
  $region2: #{binary_domain_loss.1} parent=0 // loop_pre_header
    _
  $region3: #{binary_domain_loss.1} parent=0 // loop_header
    %s15 = sphi 0, %s19
    %p16 = scmp.ge.s32.totalorder %s15, 5
    %s25 = sphi 0, %s27
    %s28 = sphi 0, %s25
    %s29 = sphi 0, %s28
    %s45 = sphi 0, %s29
    %s51 = sphi 0, %s53
    %s54 = sphi 0, %s51
    %s55 = sphi 0, %s54
    %s71 = sphi 0, %s55
    %s75 = sphi 0, %s75
    %s77 = sphi 0, %s75
    %s78 = sphi 0, %s77
    %s92 = sphi 0, %s78
    %s96 = sphi 0, %s96
    %s98 = sphi 0, %s96
    %s99 = sphi 0, %s98
    %s113 = sphi 0, %s99
    %s117 = sphi 0, %s117
    %s119 = sphi 0, %s117
    %s120 = sphi 0, %s119
    %s134 = sphi 0, %s120
    %s138 = sphi 0, %s138
    %s140 = sphi 0, %s138
    %s141 = sphi 0, %s140
    %s155 = sphi 0, %s141
    %s161 = sphi 0, %s163
    %s164 = sphi 0, %s161
    %s165 = sphi 0, %s164
    %s181 = sphi 0, %s165
    %s187 = sphi 0, %s189
    %s190 = sphi 0, %s187
    %s191 = sphi 0, %s190
    %s207 = sphi 0, %s191
  $region4: #{binary_domain_loss.1} parent=0 // loop_header_branch
    %18 = sbr.rel (%p16) target = $region8
  $region5: #{binary_domain_loss.1} parent=0 // loop_body
    %s20 = ssub.s32 %s15, 1
    %s21 = ssub.s32 %s15, 2
    %s22 = sadd.s32 %s15, 1
    %s23 = ssub.s32 %s15, %s22
    %p24 = scmp.eq.s32.totalorder %s23, 0
    %s26 = sadd.s32 %s25, 1
    %s27 = scalar_select %p24, %s25, %s26
    %p30 = pneg %p24
    %p31 = scmp.eq.s32.totalorder %s15, 2
    %p32 = por %p30, %p31
    %p33 = scmp.ne.s32.totalorder %s25, %s28
    %p34 = scmp.eq.s32.totalorder %s15, 0
    %p35 = por %p33, %p34
    %p36 = scmp.ne.s32.totalorder %s25, %s28
    %p37 = scmp.eq.s32.totalorder %s20, 2
    %p38 = por %p36, %p37
    %p39 = scmp.ne.s32.totalorder %s28, %s29
    %p40 = scmp.eq.s32.totalorder %s20, 0
    %p41 = por %p39, %p40
    %p42 = scmp.ne.s32.totalorder %s28, %s29
    %p43 = scmp.eq.s32.totalorder %s21, 2
    %p44 = por %p42, %p43
    %p46 = scmp.ne.s32.totalorder %s29, %s45
    %p47 = scmp.eq.s32.totalorder %s21, 0
    %p48 = por %p46, %p47
    %s49 = ssub.s32 %s15, %s22
    %p50 = scmp.eq.s32.totalorder %s49, 0
    %s52 = sadd.s32 %s51, 1
    %s53 = scalar_select %p50, %s51, %s52
    %p56 = pneg %p50
    %p57 = scmp.eq.s32.totalorder %s15, 2
    %p58 = por %p56, %p57
    %p59 = scmp.ne.s32.totalorder %s51, %s54
    %p60 = scmp.eq.s32.totalorder %s15, 0
    %p61 = por %p59, %p60
    %p62 = scmp.ne.s32.totalorder %s51, %s54
    %p63 = scmp.eq.s32.totalorder %s20, 2
    %p64 = por %p62, %p63
    %p65 = scmp.ne.s32.totalorder %s54, %s55
    %p66 = scmp.eq.s32.totalorder %s20, 0
    %p67 = por %p65, %p66
    %p68 = scmp.ne.s32.totalorder %s54, %s55
    %p69 = scmp.eq.s32.totalorder %s21, 2
    %p70 = por %p68, %p69
    %p72 = scmp.ne.s32.totalorder %s55, %s71
    %p73 = scmp.eq.s32.totalorder %s21, 0
    %p74 = por %p72, %p73
    %s76 = sadd.s32 %s75, 1
    %p79 = scmp.eq.s32.totalorder %s15, 2
    %p80 = scmp.ne.s32.totalorder %s75, %s77
    %p81 = scmp.eq.s32.totalorder %s15, 0
    %p82 = por %p80, %p81
    %p83 = scmp.ne.s32.totalorder %s75, %s77
    %p84 = scmp.eq.s32.totalorder %s20, 2
    %p85 = por %p83, %p84
    %p86 = scmp.ne.s32.totalorder %s77, %s78
    %p87 = scmp.eq.s32.totalorder %s20, 0
    %p88 = por %p86, %p87
    %p89 = scmp.ne.s32.totalorder %s77, %s78
    %p90 = scmp.eq.s32.totalorder %s21, 2
    %p91 = por %p89, %p90
    %p93 = scmp.ne.s32.totalorder %s78, %s92
    %p94 = scmp.eq.s32.totalorder %s21, 0
    %p95 = por %p93, %p94
    %s97 = sadd.s32 %s96, 1
    %p100 = scmp.eq.s32.totalorder %s15, 2
    %p101 = scmp.ne.s32.totalorder %s96, %s98
    %p102 = scmp.eq.s32.totalorder %s15, 0
    %p103 = por %p101, %p102
    %p104 = scmp.ne.s32.totalorder %s96, %s98
    %p105 = scmp.eq.s32.totalorder %s20, 2
    %p106 = por %p104, %p105
    %p107 = scmp.ne.s32.totalorder %s98, %s99
    %p108 = scmp.eq.s32.totalorder %s20, 0
    %p109 = por %p107, %p108
    %p110 = scmp.ne.s32.totalorder %s98, %s99
    %p111 = scmp.eq.s32.totalorder %s21, 2
    %p112 = por %p110, %p111
    %p114 = scmp.ne.s32.totalorder %s99, %s113
    %p115 = scmp.eq.s32.totalorder %s21, 0
    %p116 = por %p114, %p115
    %s118 = sadd.s32 %s117, 1
    %p121 = scmp.eq.s32.totalorder %s15, 2
    %p122 = scmp.ne.s32.totalorder %s117, %s119
    %p123 = scmp.eq.s32.totalorder %s15, 0
    %p124 = por %p122, %p123
    %p125 = scmp.ne.s32.totalorder %s117, %s119
    %p126 = scmp.eq.s32.totalorder %s20, 2
    %p127 = por %p125, %p126
    %p128 = scmp.ne.s32.totalorder %s119, %s120
    %p129 = scmp.eq.s32.totalorder %s20, 0
    %p130 = por %p128, %p129
    %p131 = scmp.ne.s32.totalorder %s119, %s120
    %p132 = scmp.eq.s32.totalorder %s21, 2
    %p133 = por %p131, %p132
    %p135 = scmp.ne.s32.totalorder %s120, %s134
    %p136 = scmp.eq.s32.totalorder %s21, 0
    %p137 = por %p135, %p136
    %s139 = sadd.s32 %s138, 1
    %p142 = scmp.eq.s32.totalorder %s15, 2
    %p143 = scmp.ne.s32.totalorder %s138, %s140
    %p144 = scmp.eq.s32.totalorder %s15, 0
    %p145 = por %p143, %p144
    %p146 = scmp.ne.s32.totalorder %s138, %s140
    %p147 = scmp.eq.s32.totalorder %s20, 2
    %p148 = por %p146, %p147
    %p149 = scmp.ne.s32.totalorder %s140, %s141
    %p150 = scmp.eq.s32.totalorder %s20, 0
    %p151 = por %p149, %p150
    %p152 = scmp.ne.s32.totalorder %s140, %s141
    %p153 = scmp.eq.s32.totalorder %s21, 2
    %p154 = por %p152, %p153
    %p156 = scmp.ne.s32.totalorder %s141, %s155
    %p157 = scmp.eq.s32.totalorder %s21, 0
    %p158 = por %p156, %p157
    %s159 = ssub.s32 %s15, %s22
    %p160 = scmp.eq.s32.totalorder %s159, 0
    %s162 = sadd.s32 %s161, 1
    %s163 = scalar_select %p160, %s161, %s162
    %p166 = pneg %p160
    %p167 = scmp.eq.s32.totalorder %s15, 2
    %p168 = por %p166, %p167
    %p169 = scmp.ne.s32.totalorder %s161, %s164
    %p170 = scmp.eq.s32.totalorder %s15, 0
    %p171 = por %p169, %p170
    %p172 = scmp.ne.s32.totalorder %s161, %s164
    %p173 = scmp.eq.s32.totalorder %s20, 2
    %p174 = por %p172, %p173
    %p175 = scmp.ne.s32.totalorder %s164, %s165
    %p176 = scmp.eq.s32.totalorder %s20, 0
    %p177 = por %p175, %p176
    %p178 = scmp.ne.s32.totalorder %s164, %s165
    %p179 = scmp.eq.s32.totalorder %s21, 2
    %p180 = por %p178, %p179
    %p182 = scmp.ne.s32.totalorder %s165, %s181
    %p183 = scmp.eq.s32.totalorder %s21, 0
    %p184 = por %p182, %p183
    %s185 = ssub.s32 %s15, %s22
    %p186 = scmp.eq.s32.totalorder %s185, 0
    %s188 = sadd.s32 %s187, 1
    %s189 = scalar_select %p186, %s187, %s188
    %p192 = pneg %p186
    %p193 = scmp.eq.s32.totalorder %s15, 2
    %p194 = por %p192, %p193
    %p195 = scmp.ne.s32.totalorder %s187, %s190
    %p196 = scmp.eq.s32.totalorder %s15, 0
    %p197 = por %p195, %p196
    %p198 = scmp.ne.s32.totalorder %s187, %s190
    %p199 = scmp.eq.s32.totalorder %s20, 2
    %p200 = por %p198, %p199
    %p201 = scmp.ne.s32.totalorder %s190, %s191
    %p202 = scmp.eq.s32.totalorder %s20, 0
    %p203 = por %p201, %p202
    %p204 = scmp.ne.s32.totalorder %s190, %s191
    %p205 = scmp.eq.s32.totalorder %s21, 2
    %p206 = por %p204, %p205
    %p208 = scmp.ne.s32.totalorder %s191, %s207
    %p209 = scmp.eq.s32.totalorder %s21, 0
    %p210 = por %p208, %p209
    %p211 = scmp.le.s32.totalorder 1, %s15
    %p212 = scmp.lt.s32.totalorder %s15, 4
    %p213 = pnand %p211, %p212
    %p214 = pneg %p213
    // Predicated region
    $region9: #{binary_domain_loss.1} parent=5 // pred_check
      _
    $region10: #{binary_domain_loss.1} parent=5 // pred_check_branch
      %216 = sbr.rel (%p213) target = $region12
    $region11: #{binary_domain_loss.1} parent=5 // pred_region
      %s217 = ssub.s32 %s15, 1
      // Predicated region
      $region13: #{binary_domain_loss.1} parent=11 // pred_check
        %p218 = pneg %p88
      $region14: #{binary_domain_loss.1} parent=11 // pred_check_branch
        %220 = sbr.rel (%p218) target = $region16
      $region15: #{binary_domain_loss.1} parent=11 // pred_region
        _
      $region16: #{binary_domain_loss.1} parent=11 // pred_fallthru
        _
      // Predicated region
      $region17: #{binary_domain_loss.1} parent=11 // pred_check
        %p221 = pneg %p109
      $region18: #{binary_domain_loss.1} parent=11 // pred_check_branch
        %223 = sbr.rel (%p221) target = $region20
      $region19: #{binary_domain_loss.1} parent=11 // pred_region
        _
      $region20: #{binary_domain_loss.1} parent=11 // pred_fallthru
        _
      // Predicated region
      $region21: #{binary_domain_loss.1} parent=11 // pred_check
        %p224 = pneg %p130
      $region22: #{binary_domain_loss.1} parent=11 // pred_check_branch
        %226 = sbr.rel (%p224) target = $region24
      $region23: #{binary_domain_loss.1} parent=11 // pred_region
        _
      $region24: #{binary_domain_loss.1} parent=11 // pred_fallthru
        _
      // Predicated region
      $region25: #{binary_domain_loss.1} parent=11 // pred_check
        %p227 = pneg %p151
      $region26: #{binary_domain_loss.1} parent=11 // pred_check_branch
        %229 = sbr.rel (%p227) target = $region28
      $region27: #{binary_domain_loss.1} parent=11 // pred_region
        _
      $region28: #{binary_domain_loss.1} parent=11 // pred_fallthru
        _
    $region12: #{binary_domain_loss.1} parent=5 // pred_fallthru
      _
    %p230 = scmp.lt.s32.totalorder %s15, 3
    // Predicated region
    $region29: #{binary_domain_loss.1} parent=5 // pred_check
      %p231 = pneg %p230
    $region30: #{binary_domain_loss.1} parent=5 // pred_check_branch
      %233 = sbr.rel (%p231) target = $region32
    $region31: #{binary_domain_loss.1} parent=5 // pred_region
      // Predicated region
      $region33: #{binary_domain_loss.1} parent=31 // pred_check
        %p234 = pneg %p35
      $region34: #{binary_domain_loss.1} parent=31 // pred_check_branch
        %236 = sbr.rel (%p234) target = $region36
      $region35: #{binary_domain_loss.1} parent=31 // pred_region
        %s237 = smul.u32 32, %s15
        %s238 = ssub.s32 75, %s237
        %p239 = scmp.lt.s32.totalorder %s238, 32
        %s240 = scalar_select %p239, %s238, 32
        %s241 = smul.u32 128, %s240
        %p242 = scmp.lt.s32.totalorder %s237, 74
        %s243 = scalar_select %p242, %s237, 74
        %s244 = smul.addr %s243, 8
        %s245 = scalar_lea.vmem %s0, %s244
        %s246 = smul.u32 32, %s15
        %s247 = ssub.s32 75, %s246
        %p248 = scmp.lt.s32.totalorder %s247, 32
        %s249 = scalar_select %p248, %s247, 32
        %s250 = smul.u32 128, %s249
      $region36: #{binary_domain_loss.1} parent=31 // pred_fallthru
        _
      // Predicated region
      $region37: #{binary_domain_loss.1} parent=31 // pred_check
        %p251 = pneg %p61
      $region38: #{binary_domain_loss.1} parent=31 // pred_check_branch
        %253 = sbr.rel (%p251) target = $region40
      $region39: #{binary_domain_loss.1} parent=31 // pred_region
        %s254 = smul.u32 2, %s15
        %s255 = ssub.s32 5, %s254
        %p256 = scmp.lt.s32.totalorder %s255, 2
        %s257 = scalar_select %p256, %s255, 2
        %s258 = smul.u32 16, %s257
        %p259 = scmp.lt.s32.totalorder %s254, 4
        %s260 = scalar_select %p259, %s254, 4
        %s261 = scalar_lea.vmem %s1, %s260
        %s262 = smul.u32 2, %s15
        %s263 = ssub.s32 5, %s262
        %p264 = scmp.lt.s32.totalorder %s263, 2
        %s265 = scalar_select %p264, %s263, 2
        %s266 = smul.u32 16, %s265
      $region40: #{binary_domain_loss.1} parent=31 // pred_fallthru
        _
    $region32: #{binary_domain_loss.1} parent=5 // pred_fallthru
      _
    %p267 = scmp.le.s32.totalorder 1, %s15
    %p268 = scmp.lt.s32.totalorder %s15, 4
    %p269 = pnand %p267, %p268
    %p270 = pneg %p269
    // Predicated region
    $region41: #{binary_domain_loss.1} parent=5 // pred_check
      _
    $region42: #{binary_domain_loss.1} parent=5 // pred_check_branch
      %272 = sbr.rel (%p269) target = $region44
    $region43: #{binary_domain_loss.1} parent=5 // pred_region
      %s273 = ssub.s32 %s15, 1
      %s274 = smul.u32 32, %s20
      %s275 = ssub.s32 75, %s274
      %p276 = scmp.lt.s32.totalorder %s275, 32
      %s277 = scalar_select %p276, %s275, 32
      %s278 = smul.u32 128, %s277
      %p279 = scmp.lt.s32.totalorder %s274, 74
      %s280 = scalar_select %p279, %s274, 74
      %s281 = smul.addr %s280, 8
      %s282 = scalar_lea.vmem %s0, %s281
      %p283 = pneg %p41
      %p284 = pneg %p38
      %s285 = smul.u32 2, %s20
      %s286 = ssub.s32 5, %s285
      %p287 = scmp.lt.s32.totalorder %s286, 2
      %s288 = scalar_select %p287, %s286, 2
      %s289 = smul.u32 16, %s288
      %p290 = scmp.lt.s32.totalorder %s285, 4
      %s291 = scalar_select %p290, %s285, 4
      %s292 = scalar_lea.vmem %s1, %s291
      %p293 = pneg %p67
      %p294 = pneg %p64
      %p295 = pneg %p88
      %p296 = pneg %p85
      %p297 = pneg %p109
      %p298 = pneg %p106
      %p299 = pneg %p130
      %p300 = pneg %p127
      %p301 = pneg %p151
      %p302 = pneg %p148
      %p303 = pneg %p177
      %p304 = pneg %p174
      %p305 = scmp.lt.s32.totalorder %s20, 2
      %s306 = scalar_select %p305, %s20, 2
      %s307 = scalar_lea.vmem %s6, %s306
      %p308 = pneg %p203
      %p309 = pneg %p200
      %p310 = scmp.lt.s32.totalorder %s20, 2
      %s311 = scalar_select %p310, %s20, 2
      %s312 = scalar_lea.vmem %s7, %s311
      %s313 = smul.u32 32, %s20
      %s314 = ssub.s32 75, %s313
      %p315 = scmp.lt.s32.totalorder %s314, 32
      %s316 = scalar_select %p315, %s314, 32
      %s317 = smul.u32 128, %s316
      %p318 = scmp.lt.s32.totalorder %s313, 74
      %s319 = scalar_select %p318, %s313, 74
      %s320 = smul.addr %s319, 8
      %s321 = scalar_lea.vmem %s0, %s320
      %s322 = smul.u32 32, %s20
      %s323 = ssub.s32 75, %s322
      %p324 = scmp.lt.s32.totalorder %s323, 32
      %s325 = scalar_select %p324, %s323, 32
      %s326 = smul.u32 128, %s325
      %s327 = smul.u32 2, %s20
      %s328 = ssub.s32 5, %s327
      %p329 = scmp.lt.s32.totalorder %s328, 2
      %s330 = scalar_select %p329, %s328, 2
      %s331 = smul.u32 16, %s330
      %p332 = scmp.lt.s32.totalorder %s327, 4
      %s333 = scalar_select %p332, %s327, 4
      %s334 = scalar_lea.vmem %s1, %s333
      %s335 = smul.u32 2, %s20
      %s336 = ssub.s32 5, %s335
      %p337 = scmp.lt.s32.totalorder %s336, 2
      %s338 = scalar_select %p337, %s336, 2
      %s339 = smul.u32 16, %s338
      %p340 = scmp.lt.s32.totalorder %s20, 2
      %s341 = scalar_select %p340, %s20, 2
      %s342 = scalar_lea.vmem %s6, %s341
      %p343 = scmp.lt.s32.totalorder %s20, 2
      %s344 = scalar_select %p343, %s20, 2
      %s345 = scalar_lea.vmem %s7, %s344
      %v347 = vld [vmem:[%s321] sm:$0xff]
      %v348 = vld [vmem:[%s321 + $0x8] sm:$0xff]
      %v349 = vld [vmem:[%s321 + $0x10] sm:$0xff]
      %v350 = vld [vmem:[%s321 + $0x18] sm:$0xff]
      %v351 = vld [vmem:[%s321 + $0x20] sm:$0xff]
      %v352 = vld [vmem:[%s321 + $0x28] sm:$0xff]
      %v353 = vld [vmem:[%s321 + $0x30] sm:$0xff]
      %v354 = vld [vmem:[%s321 + $0x38] sm:$0xff]
      %v355 = vld [vmem:[%s321 + $0x40] sm:$0xff]
      %v356 = vld [vmem:[%s321 + $0x48] sm:$0xff]
      %v357 = vld [vmem:[%s321 + $0x50] sm:$0xff]
      %v358 = vld [vmem:[%s321 + $0x58] sm:$0xff]
      %v359 = vld [vmem:[%s321 + $0x60] sm:$0xff]
      %v360 = vld [vmem:[%s321 + $0x68] sm:$0xff]
      %v361 = vld [vmem:[%s321 + $0x70] sm:$0xff]
      %v362 = vld [vmem:[%s321 + $0x78] sm:$0xff]
      %v363 = vld [vmem:[%s321 + $0x80] sm:$0xff]
      %v364 = vld [vmem:[%s321 + $0x88] sm:$0xff]
      %v365 = vld [vmem:[%s321 + $0x90] sm:$0xff]
      %v366 = vld [vmem:[%s321 + $0x98] sm:$0xff]
      %v367 = vld [vmem:[%s321 + $0xa0] sm:$0xff]
      %v368 = vld [vmem:[%s321 + $0xa8] sm:$0xff]
      %v369 = vld [vmem:[%s321 + $0xb0] sm:$0xff]
      %v370 = vld [vmem:[%s321 + $0xb8] sm:$0xff]
      %v371 = vld [vmem:[%s321 + $0xc0] sm:$0xff]
      %v372 = vld [vmem:[%s321 + $0xc8] sm:$0xff]
      %v373 = vld [vmem:[%s321 + $0xd0] sm:$0xff]
      %v374 = vld [vmem:[%s321 + $0xd8] sm:$0xff]
      %v375 = vld [vmem:[%s321 + $0xe0] sm:$0xff]
      %v376 = vld [vmem:[%s321 + $0xe8] sm:$0xff]
      %v377 = vld [vmem:[%s321 + $0xf0] sm:$0xff]
      %v378 = vld [vmem:[%s321 + $0xf8] sm:$0xff]
      %v379 = vpack.c.bf16 %v348, %v347
      %v380 = vpack.c.bf16 %v350, %v349
      %v381 = vpack.c.bf16 %v352, %v351
      %v382 = vpack.c.bf16 %v354, %v353
      %v383 = vpack.c.bf16 %v356, %v355
      %v384 = vpack.c.bf16 %v358, %v357
      %v385 = vpack.c.bf16 %v360, %v359
      %v386 = vpack.c.bf16 %v362, %v361
      %v387 = vpack.c.bf16 %v364, %v363
      %v388 = vpack.c.bf16 %v366, %v365
      %v389 = vpack.c.bf16 %v368, %v367
      %v390 = vpack.c.bf16 %v370, %v369
      %v391 = vpack.c.bf16 %v372, %v371
      %v392 = vpack.c.bf16 %v374, %v373
      %v393 = vpack.c.bf16 %v376, %v375
      %v394 = vpack.c.bf16 %v378, %v377
      %v395 = vld [vmem:[%s2] sm:$0xff]
      %v396 = vld [vmem:[%s2 + $0x8] sm:$0xff]
      %v397 = vld [vmem:[%s2 + $0x10] sm:$0xff]
      %v398 = vld [vmem:[%s2 + $0x18] sm:$0xff]
      %v399 = vld [vmem:[%s3] sm:$0xff]
      %v400 = vld [vmem:[%s3 + $0x8] sm:$0xff]
      %v401 = vld [vmem:[%s3 + $0x10] sm:$0xff]
      %v402 = vld [vmem:[%s3 + $0x18] sm:$0xff]
      %v403 = vld [vmem:[%s3 + $0x20] sm:$0xff]
      %v404 = vld [vmem:[%s3 + $0x28] sm:$0xff]
      %v405 = vld [vmem:[%s3 + $0x30] sm:$0xff]
      %v406 = vld [vmem:[%s3 + $0x38] sm:$0xff]
      %v407 = vld [vmem:[%s3 + $0x40] sm:$0xff]
      %v408 = vld [vmem:[%s3 + $0x48] sm:$0xff]
      %v409 = vld [vmem:[%s3 + $0x50] sm:$0xff]
      %v410 = vld [vmem:[%s3 + $0x58] sm:$0xff]
      %v411 = vld [vmem:[%s3 + $0x60] sm:$0xff]
      %v412 = vld [vmem:[%s3 + $0x68] sm:$0xff]
      %v413 = vld [vmem:[%s3 + $0x70] sm:$0xff]
      %v414 = vld [vmem:[%s3 + $0x78] sm:$0xff]
      %v415 = vld [vmem:[%s3 + $0x80] sm:$0xff]
      %v416 = vld [vmem:[%s3 + $0x88] sm:$0xff]
      %v417 = vld [vmem:[%s3 + $0x90] sm:$0xff]
      %v418 = vld [vmem:[%s3 + $0x98] sm:$0xff]
      %v419 = vld [vmem:[%s3 + $0xa0] sm:$0xff]
      %v420 = vld [vmem:[%s3 + $0xa8] sm:$0xff]
      %v421 = vld [vmem:[%s3 + $0xb0] sm:$0xff]
      %v422 = vld [vmem:[%s3 + $0xb8] sm:$0xff]
      %v423 = vld [vmem:[%s3 + $0xc0] sm:$0xff]
      %v424 = vld [vmem:[%s3 + $0xc8] sm:$0xff]
      %v425 = vld [vmem:[%s3 + $0xd0] sm:$0xff]
      %v426 = vld [vmem:[%s3 + $0xd8] sm:$0xff]
      %v427 = vld [vmem:[%s3 + $0xe0] sm:$0xff]
      %v428 = vld [vmem:[%s3 + $0xe8] sm:$0xff]
      %v429 = vld [vmem:[%s3 + $0xf0] sm:$0xff]
      %v430 = vld [vmem:[%s3 + $0xf8] sm:$0xff]
      %432 = vset.pattern.permute.xlu0 0
      %433 = vperm.xlu0 %432, %v399
      %v434 = vpop.permute.xlu0 %433
      %437 = vset.pattern.permute.xlu0 0
      %438 = vperm.xlu0 %437, %v400
      %v439 = vpop.permute.xlu0 %438
      %442 = vset.pattern.permute.xlu0 0
      %443 = vperm.xlu0 %442, %v401
      %v444 = vpop.permute.xlu0 %443
      %447 = vset.pattern.permute.xlu0 0
      %448 = vperm.xlu0 %447, %v402
      %v449 = vpop.permute.xlu0 %448
      %452 = vset.pattern.permute.xlu0 0
      %453 = vperm.xlu0 %452, %v403
      %v454 = vpop.permute.xlu0 %453
      %457 = vset.pattern.permute.xlu0 0
      %458 = vperm.xlu0 %457, %v404
      %v459 = vpop.permute.xlu0 %458
      %462 = vset.pattern.permute.xlu0 0
      %463 = vperm.xlu0 %462, %v405
      %v464 = vpop.permute.xlu0 %463
      %467 = vset.pattern.permute.xlu0 0
      %468 = vperm.xlu0 %467, %v406
      %v469 = vpop.permute.xlu0 %468
      %472 = vset.pattern.permute.xlu0 0
      %473 = vperm.xlu0 %472, %v407
      %v474 = vpop.permute.xlu0 %473
      %477 = vset.pattern.permute.xlu0 0
      %478 = vperm.xlu0 %477, %v408
      %v479 = vpop.permute.xlu0 %478
      %482 = vset.pattern.permute.xlu0 0
      %483 = vperm.xlu0 %482, %v409
      %v484 = vpop.permute.xlu0 %483
      %487 = vset.pattern.permute.xlu0 0
      %488 = vperm.xlu0 %487, %v410
      %v489 = vpop.permute.xlu0 %488
      %492 = vset.pattern.permute.xlu0 0
      %493 = vperm.xlu0 %492, %v411
      %v494 = vpop.permute.xlu0 %493
      %497 = vset.pattern.permute.xlu0 0
      %498 = vperm.xlu0 %497, %v412
      %v499 = vpop.permute.xlu0 %498
      %502 = vset.pattern.permute.xlu0 0
      %503 = vperm.xlu0 %502, %v413
      %v504 = vpop.permute.xlu0 %503
      %507 = vset.pattern.permute.xlu0 0
      %508 = vperm.xlu0 %507, %v414
      %v509 = vpop.permute.xlu0 %508
      %512 = vset.pattern.permute.xlu0 0
      %513 = vperm.xlu0 %512, %v415
      %v514 = vpop.permute.xlu0 %513
      %517 = vset.pattern.permute.xlu0 0
      %518 = vperm.xlu0 %517, %v416
      %v519 = vpop.permute.xlu0 %518
      %522 = vset.pattern.permute.xlu0 0
      %523 = vperm.xlu0 %522, %v417
      %v524 = vpop.permute.xlu0 %523
      %527 = vset.pattern.permute.xlu0 0
      %528 = vperm.xlu0 %527, %v418
      %v529 = vpop.permute.xlu0 %528
      %532 = vset.pattern.permute.xlu0 0
      %533 = vperm.xlu0 %532, %v419
      %v534 = vpop.permute.xlu0 %533
      %537 = vset.pattern.permute.xlu0 0
      %538 = vperm.xlu0 %537, %v420
      %v539 = vpop.permute.xlu0 %538
      %542 = vset.pattern.permute.xlu0 0
      %543 = vperm.xlu0 %542, %v421
      %v544 = vpop.permute.xlu0 %543
      %547 = vset.pattern.permute.xlu0 0
      %548 = vperm.xlu0 %547, %v422
      %v549 = vpop.permute.xlu0 %548
      %552 = vset.pattern.permute.xlu0 0
      %553 = vperm.xlu0 %552, %v423
      %v554 = vpop.permute.xlu0 %553
      %557 = vset.pattern.permute.xlu0 0
      %558 = vperm.xlu0 %557, %v424
      %v559 = vpop.permute.xlu0 %558
      %562 = vset.pattern.permute.xlu0 0
      %563 = vperm.xlu0 %562, %v425
      %v564 = vpop.permute.xlu0 %563
      %567 = vset.pattern.permute.xlu0 0
      %568 = vperm.xlu0 %567, %v426
      %v569 = vpop.permute.xlu0 %568
      %572 = vset.pattern.permute.xlu0 0
      %573 = vperm.xlu0 %572, %v427
      %v574 = vpop.permute.xlu0 %573
      %577 = vset.pattern.permute.xlu0 0
      %578 = vperm.xlu0 %577, %v428
      %v579 = vpop.permute.xlu0 %578
      %582 = vset.pattern.permute.xlu0 0
      %583 = vperm.xlu0 %582, %v429
      %v584 = vpop.permute.xlu0 %583
      %587 = vset.pattern.permute.xlu0 0
      %588 = vperm.xlu0 %587, %v430
      %v589 = vpop.permute.xlu0 %588
      %v595 = vunpack.c.l.b16 %v395
      %v596 = vunpack.c.h.b16 %v395
      %v597 = vunpack.c.l.b16 %v396
      %v598 = vunpack.c.h.b16 %v396
      %v599 = vunpack.c.l.b16 %v397
      %v600 = vunpack.c.h.b16 %v397
      %v601 = vunpack.c.l.b16 %v398
      %v602 = vunpack.c.h.b16 %v398
      %v603 = vpack.c.b16 %v597, %v595
      %v604 = vpack.c.b16 %v598, %v596
      %v605 = vpack.c.b16 %v601, %v599
      %v606 = vpack.c.b16 %v602, %v600
      %611 = vxpose.xlu0.c.b16.start [1/8] %v603, 128
      %612 = vxpose.xlu0.c.b16.cont [2/8] %v605, 128
      %613 = vxpose.xlu0.c.b16.cont [3/8] 0, 128
      %614 = vxpose.xlu0.c.b16.cont [4/8] 0, 128
      %615 = vxpose.xlu0.c.b16.cont [5/8] 0, 128
      %616 = vxpose.xlu0.c.b16.cont [6/8] 0, 128
      %617 = vxpose.xlu0.c.b16.cont [7/8] 0, 128
      %618 = vxpose.xlu0.c.b16.end [8/8] 0, 128
      %v619 = vpop.trf.xlu0
      %v620 = vpop.trf.xlu0
      %v621 = vpop.trf.xlu0
      %v622 = vpop.trf.xlu0
      %v623 = vpop.trf.xlu0
      %v624 = vpop.trf.xlu0
      %v625 = vpop.trf.xlu0
      %v626 = vpop.trf.xlu0
      %627 = vxpose.xlu0.c.b16.start [1/8] %v604, 128
      %628 = vxpose.xlu0.c.b16.cont [2/8] %v606, 128
      %629 = vxpose.xlu0.c.b16.cont [3/8] 0, 128
      %630 = vxpose.xlu0.c.b16.cont [4/8] 0, 128
      %631 = vxpose.xlu0.c.b16.cont [5/8] 0, 128
      %632 = vxpose.xlu0.c.b16.cont [6/8] 0, 128
      %633 = vxpose.xlu0.c.b16.cont [7/8] 0, 128
      %634 = vxpose.xlu0.c.b16.end [8/8] 0, 128
      %v635 = vpop.trf.xlu0
      %v636 = vpop.trf.xlu0
      %v637 = vpop.trf.xlu0
      %v638 = vpop.trf.xlu0
      %v639 = vpop.trf.xlu0
      %v640 = vpop.trf.xlu0
      %v641 = vpop.trf.xlu0
      %v642 = vpop.trf.xlu0
      %vm643 = vcmask 261120
      %v645 = vsel %vm643, %v619, 0
      %v648 = vsel %vm643, %v620, 0
      %v651 = vsel %vm643, %v621, 0
      %v654 = vsel %vm643, %v622, 0
      %v657 = vsel %vm643, %v623, 0
      %v660 = vsel %vm643, %v624, 0
      %v663 = vsel %vm643, %v625, 0
      %v666 = vsel %vm643, %v626, 0
      %v669 = vsel %vm643, %v635, 0
      %v672 = vsel %vm643, %v636, 0
      %v675 = vsel %vm643, %v637, 0
      %v678 = vsel %vm643, %v638, 0
      %v681 = vsel %vm643, %v639, 0
      %v684 = vsel %vm643, %v640, 0
      %v687 = vsel %vm643, %v641, 0
      %v690 = vsel %vm643, %v642, 0
      %v693 = vsel %vm643, %v379, 0
      %v696 = vsel %vm643, %v380, 0
      %v699 = vsel %vm643, %v381, 0
      %v702 = vsel %vm643, %v382, 0
      %v705 = vsel %vm643, %v383, 0
      %v708 = vsel %vm643, %v384, 0
      %v711 = vsel %vm643, %v385, 0
      %v714 = vsel %vm643, %v386, 0
      %v717 = vsel %vm643, %v387, 0
      %v720 = vsel %vm643, %v388, 0
      %v723 = vsel %vm643, %v389, 0
      %v726 = vsel %vm643, %v390, 0
      %v729 = vsel %vm643, %v391, 0
      %v732 = vsel %vm643, %v392, 0
      %v735 = vsel %vm643, %v393, 0
      %v738 = vsel %vm643, %v394, 0
      %740 = vmatprep.subr.bf16.mxu0 0
      %741 = vmatpush1.bf16.xpose.msra.mxu0 %v714
      %742 = vmatprep.subr.bf16.mxu0 0
      %743 = vmatpush1.bf16.xpose.msra.mxu0 %v711
      %744 = vmatprep.subr.bf16.mxu0 0
      %745 = vmatpush1.bf16.xpose.msra.mxu0 %v708
      %746 = vmatprep.subr.bf16.mxu0 0
      %747 = vmatpush1.bf16.xpose.msra.mxu0 %v705
      %748 = vmatprep.subr.bf16.mxu0 0
      %749 = vmatpush1.bf16.xpose.msra.mxu0 %v702
      %750 = vmatprep.subr.bf16.mxu0 0
      %751 = vmatpush1.bf16.xpose.msra.mxu0 %v699
      %752 = vmatprep.subr.bf16.mxu0 0
      %753 = vmatpush1.bf16.xpose.msra.mxu0 %v696
      %754 = vmatprep.subr.bf16.mxu0 0
      %755 = vmatpush1.bf16.xpose.msra.mxu0 %v693
      %756 = vmatprep.subr.bf16.mxu0 0
      %757 = vmatpush2.bf16.xpose.msra.mxu0 %v738
      %758 = vmatprep.subr.bf16.mxu0 0
      %759 = vmatpush2.bf16.xpose.msra.mxu0 %v735
      %760 = vmatprep.subr.bf16.mxu0 0
      %761 = vmatpush2.bf16.xpose.msra.mxu0 %v732
      %762 = vmatprep.subr.bf16.mxu0 0
      %763 = vmatpush2.bf16.xpose.msra.mxu0 %v729
      %764 = vmatprep.subr.bf16.mxu0 0
      %765 = vmatpush2.bf16.xpose.msra.mxu0 %v726
      %766 = vmatprep.subr.bf16.mxu0 0
      %767 = vmatpush2.bf16.xpose.msra.mxu0 %v723
      %768 = vmatprep.subr.bf16.mxu0 0
      %769 = vmatpush2.bf16.xpose.msra.mxu0 %v720
      %770 = vmatprep.subr.bf16.mxu0 0
      %771 = vmatpush2.bf16.xpose.msra.mxu0 %v717
      %772 = vmatprep.mubr.bf16.mxu0 0
      %773 = vmatmul.mubr.bf16.gmra.mxu0 %v645
      %v774 = vpop.f32.mrf.mxu0
      %v775 = vadd.f32 %v434, %v774
      %v776 = vpop.f32.mrf.mxu0
      %v777 = vadd.f32 %v434, %v776
      %v778 = vpop.f32.mrf.mxu0
      %v779 = vadd.f32 %v439, %v778
      %v780 = vpop.f32.mrf.mxu0
      %v781 = vadd.f32 %v439, %v780
      %782 = vmatprep.mubr.bf16.mxu0 0
      %783 = vmatmul.mubr.bf16.gmra.mxu0 %v648
      %v784 = vpop.f32.mrf.mxu0
      %v785 = vadd.f32 %v444, %v784
      %v786 = vpop.f32.mrf.mxu0
      %v787 = vadd.f32 %v444, %v786
      %v788 = vpop.f32.mrf.mxu0
      %v789 = vadd.f32 %v449, %v788
      %v790 = vpop.f32.mrf.mxu0
      %v791 = vadd.f32 %v449, %v790
      %792 = vmatprep.mubr.bf16.mxu0 0
      %793 = vmatmul.mubr.bf16.gmra.mxu0 %v651
      %v794 = vpop.f32.mrf.mxu0
      %v795 = vadd.f32 %v454, %v794
      %v796 = vpop.f32.mrf.mxu0
      %v797 = vadd.f32 %v454, %v796
      %v798 = vpop.f32.mrf.mxu0
      %v799 = vadd.f32 %v459, %v798
      %v800 = vpop.f32.mrf.mxu0
      %v801 = vadd.f32 %v459, %v800
      %802 = vmatprep.mubr.bf16.mxu0 0
      %803 = vmatmul.mubr.bf16.gmra.mxu0 %v654
      %v804 = vpop.f32.mrf.mxu0
      %v805 = vadd.f32 %v464, %v804
      %v806 = vpop.f32.mrf.mxu0
      %v807 = vadd.f32 %v464, %v806
      %v808 = vpop.f32.mrf.mxu0
      %v809 = vadd.f32 %v469, %v808
      %v810 = vpop.f32.mrf.mxu0
      %v811 = vadd.f32 %v469, %v810
      %812 = vmatprep.mubr.bf16.mxu0 0
      %813 = vmatmul.mubr.bf16.gmra.mxu0 %v657
      %v814 = vpop.f32.mrf.mxu0
      %v815 = vadd.f32 %v474, %v814
      %v816 = vpop.f32.mrf.mxu0
      %v817 = vadd.f32 %v474, %v816
      %v818 = vpop.f32.mrf.mxu0
      %v819 = vadd.f32 %v479, %v818
      %v820 = vpop.f32.mrf.mxu0
      %v821 = vadd.f32 %v479, %v820
      %822 = vmatprep.mubr.bf16.mxu0 0
      %823 = vmatmul.mubr.bf16.gmra.mxu0 %v660
      %v824 = vpop.f32.mrf.mxu0
      %v825 = vadd.f32 %v484, %v824
      %v826 = vpop.f32.mrf.mxu0
      %v827 = vadd.f32 %v484, %v826
      %v828 = vpop.f32.mrf.mxu0
      %v829 = vadd.f32 %v489, %v828
      %v830 = vpop.f32.mrf.mxu0
      %v831 = vadd.f32 %v489, %v830
      %832 = vmatprep.mubr.bf16.mxu0 0
      %833 = vmatmul.mubr.bf16.gmra.mxu0 %v663
      %v834 = vpop.f32.mrf.mxu0
      %v835 = vadd.f32 %v494, %v834
      %v836 = vpop.f32.mrf.mxu0
      %v837 = vadd.f32 %v494, %v836
      %v838 = vpop.f32.mrf.mxu0
      %v839 = vadd.f32 %v499, %v838
      %v840 = vpop.f32.mrf.mxu0
      %v841 = vadd.f32 %v499, %v840
      %842 = vmatprep.mubr.bf16.mxu0 0
      %843 = vmatmul.mubr.bf16.gmra.mxu0 %v666
      %v844 = vpop.f32.mrf.mxu0
      %v845 = vadd.f32 %v504, %v844
      %v846 = vpop.f32.mrf.mxu0
      %v847 = vadd.f32 %v504, %v846
      %v848 = vpop.f32.mrf.mxu0
      %v849 = vadd.f32 %v509, %v848
      %v850 = vpop.f32.mrf.mxu0
      %v851 = vadd.f32 %v509, %v850
      %852 = vmatprep.mubr.bf16.mxu0 0
      %853 = vmatmul.mubr.bf16.gmra.mxu0 %v669
      %v854 = vpop.f32.mrf.mxu0
      %v855 = vadd.f32 %v514, %v854
      %v856 = vpop.f32.mrf.mxu0
      %v857 = vadd.f32 %v514, %v856
      %v858 = vpop.f32.mrf.mxu0
      %v859 = vadd.f32 %v519, %v858
      %v860 = vpop.f32.mrf.mxu0
      %v861 = vadd.f32 %v519, %v860
      %862 = vmatprep.mubr.bf16.mxu0 0
      %863 = vmatmul.mubr.bf16.gmra.mxu0 %v672
      %v864 = vpop.f32.mrf.mxu0
      %v865 = vadd.f32 %v524, %v864
      %v866 = vpop.f32.mrf.mxu0
      %v867 = vadd.f32 %v524, %v866
      %v868 = vpop.f32.mrf.mxu0
      %v869 = vadd.f32 %v529, %v868
      %v870 = vpop.f32.mrf.mxu0
      %v871 = vadd.f32 %v529, %v870
      %872 = vmatprep.mubr.bf16.mxu0 0
      %873 = vmatmul.mubr.bf16.gmra.mxu0 %v675
      %v874 = vpop.f32.mrf.mxu0
      %v875 = vadd.f32 %v534, %v874
      %v876 = vpop.f32.mrf.mxu0
      %v877 = vadd.f32 %v534, %v876
      %v878 = vpop.f32.mrf.mxu0
      %v879 = vadd.f32 %v539, %v878
      %v880 = vpop.f32.mrf.mxu0
      %v881 = vadd.f32 %v539, %v880
      %882 = vmatprep.mubr.bf16.mxu0 0
      %883 = vmatmul.mubr.bf16.gmra.mxu0 %v678
      %v884 = vpop.f32.mrf.mxu0
      %v885 = vadd.f32 %v544, %v884
      %v886 = vpop.f32.mrf.mxu0
      %v887 = vadd.f32 %v544, %v886
      %v888 = vpop.f32.mrf.mxu0
      %v889 = vadd.f32 %v549, %v888
      %v890 = vpop.f32.mrf.mxu0
      %v891 = vadd.f32 %v549, %v890
      %892 = vmatprep.mubr.bf16.mxu0 0
      %893 = vmatmul.mubr.bf16.gmra.mxu0 %v681
      %v894 = vpop.f32.mrf.mxu0
      %v895 = vadd.f32 %v554, %v894
      %v896 = vpop.f32.mrf.mxu0
      %v897 = vadd.f32 %v554, %v896
      %v898 = vpop.f32.mrf.mxu0
      %v899 = vadd.f32 %v559, %v898
      %v900 = vpop.f32.mrf.mxu0
      %v901 = vadd.f32 %v559, %v900
      %902 = vmatprep.mubr.bf16.mxu0 0
      %903 = vmatmul.mubr.bf16.gmra.mxu0 %v684
      %v904 = vpop.f32.mrf.mxu0
      %v905 = vadd.f32 %v564, %v904
      %v906 = vpop.f32.mrf.mxu0
      %v907 = vadd.f32 %v564, %v906
      %v908 = vpop.f32.mrf.mxu0
      %v909 = vadd.f32 %v569, %v908
      %v910 = vpop.f32.mrf.mxu0
      %v911 = vadd.f32 %v569, %v910
      %912 = vmatprep.mubr.bf16.mxu0 0
      %913 = vmatmul.mubr.bf16.gmra.mxu0 %v687
      %v914 = vpop.f32.mrf.mxu0
      %v915 = vadd.f32 %v574, %v914
      %v916 = vpop.f32.mrf.mxu0
      %v917 = vadd.f32 %v574, %v916
      %v918 = vpop.f32.mrf.mxu0
      %v919 = vadd.f32 %v579, %v918
      %v920 = vpop.f32.mrf.mxu0
      %v921 = vadd.f32 %v579, %v920
      %922 = vmatprep.mubr.bf16.mxu0 0
      %923 = vmatmul.mubr.bf16.gmra.mxu0 %v690
      %v924 = vpop.f32.mrf.mxu0
      %v925 = vadd.f32 %v584, %v924
      %v926 = vpop.f32.mrf.mxu0
      %v927 = vadd.f32 %v584, %v926
      %v928 = vpop.f32.mrf.mxu0
      %v929 = vadd.f32 %v589, %v928
      %v930 = vpop.f32.mrf.mxu0
      %v931 = vadd.f32 %v589, %v930
      %932 = vdwg.mxu0
      %v933 = vmax.f32 %v775, 0.0
      %v934 = vmax.f32 %v777, 0.0
      %v935 = vmax.f32 %v779, 0.0
      %v936 = vmax.f32 %v781, 0.0
      %v937 = vmax.f32 %v785, 0.0
      %v938 = vmax.f32 %v787, 0.0
      %v939 = vmax.f32 %v789, 0.0
      %v940 = vmax.f32 %v791, 0.0
      %v941 = vmax.f32 %v795, 0.0
      %v942 = vmax.f32 %v797, 0.0
      %v943 = vmax.f32 %v799, 0.0
      %v944 = vmax.f32 %v801, 0.0
      %v945 = vmax.f32 %v805, 0.0
      %v946 = vmax.f32 %v807, 0.0
      %v947 = vmax.f32 %v809, 0.0
      %v948 = vmax.f32 %v811, 0.0
      %v949 = vmax.f32 %v815, 0.0
      %v950 = vmax.f32 %v817, 0.0
      %v951 = vmax.f32 %v819, 0.0
      %v952 = vmax.f32 %v821, 0.0
      %v953 = vmax.f32 %v825, 0.0
      %v954 = vmax.f32 %v827, 0.0
      %v955 = vmax.f32 %v829, 0.0
      %v956 = vmax.f32 %v831, 0.0
      %v957 = vmax.f32 %v835, 0.0
      %v958 = vmax.f32 %v837, 0.0
      %v959 = vmax.f32 %v839, 0.0
      %v960 = vmax.f32 %v841, 0.0
      %v961 = vmax.f32 %v845, 0.0
      %v962 = vmax.f32 %v847, 0.0
      %v963 = vmax.f32 %v849, 0.0
      %v964 = vmax.f32 %v851, 0.0
      %v965 = vmax.f32 %v855, 0.0
      %v966 = vmax.f32 %v857, 0.0
      %v967 = vmax.f32 %v859, 0.0
      %v968 = vmax.f32 %v861, 0.0
      %v969 = vmax.f32 %v865, 0.0
      %v970 = vmax.f32 %v867, 0.0
      %v971 = vmax.f32 %v869, 0.0
      %v972 = vmax.f32 %v871, 0.0
      %v973 = vmax.f32 %v875, 0.0
      %v974 = vmax.f32 %v877, 0.0
      %v975 = vmax.f32 %v879, 0.0
      %v976 = vmax.f32 %v881, 0.0
      %v977 = vmax.f32 %v885, 0.0
      %v978 = vmax.f32 %v887, 0.0
      %v979 = vmax.f32 %v889, 0.0
      %v980 = vmax.f32 %v891, 0.0
      %v981 = vmax.f32 %v895, 0.0
      %v982 = vmax.f32 %v897, 0.0
      %v983 = vmax.f32 %v899, 0.0
      %v984 = vmax.f32 %v901, 0.0
      %v985 = vmax.f32 %v905, 0.0
      %v986 = vmax.f32 %v907, 0.0
      %v987 = vmax.f32 %v909, 0.0
      %v988 = vmax.f32 %v911, 0.0
      %v989 = vmax.f32 %v915, 0.0
      %v990 = vmax.f32 %v917, 0.0
      %v991 = vmax.f32 %v919, 0.0
      %v992 = vmax.f32 %v921, 0.0
      %v993 = vmax.f32 %v925, 0.0
      %v994 = vmax.f32 %v927, 0.0
      %v995 = vmax.f32 %v929, 0.0
      %v996 = vmax.f32 %v931, 0.0
      %v997 = vld [vmem:[%s4] sm:$0x3]
      %v998 = vpack.c.bf16 %v935, %v933
      %v999 = vpack.c.bf16 %v936, %v934
      %v1000 = vpack.c.bf16 %v939, %v937
      %v1001 = vpack.c.bf16 %v940, %v938
      %v1002 = vpack.c.bf16 %v943, %v941
      %v1003 = vpack.c.bf16 %v944, %v942
      %v1004 = vpack.c.bf16 %v947, %v945
      %v1005 = vpack.c.bf16 %v948, %v946
      %v1006 = vpack.c.bf16 %v951, %v949
      %v1007 = vpack.c.bf16 %v952, %v950
      %v1008 = vpack.c.bf16 %v955, %v953
      %v1009 = vpack.c.bf16 %v956, %v954
      %v1010 = vpack.c.bf16 %v959, %v957
      %v1011 = vpack.c.bf16 %v960, %v958
      %v1012 = vpack.c.bf16 %v963, %v961
      %v1013 = vpack.c.bf16 %v964, %v962
      %v1014 = vpack.c.bf16 %v967, %v965
      %v1015 = vpack.c.bf16 %v968, %v966
      %v1016 = vpack.c.bf16 %v971, %v969
      %v1017 = vpack.c.bf16 %v972, %v970
      %v1018 = vpack.c.bf16 %v975, %v973
      %v1019 = vpack.c.bf16 %v976, %v974
      %v1020 = vpack.c.bf16 %v979, %v977
      %v1021 = vpack.c.bf16 %v980, %v978
      %v1022 = vpack.c.bf16 %v983, %v981
      %v1023 = vpack.c.bf16 %v984, %v982
      %v1024 = vpack.c.bf16 %v987, %v985
      %v1025 = vpack.c.bf16 %v988, %v986
      %v1026 = vpack.c.bf16 %v991, %v989
      %v1027 = vpack.c.bf16 %v992, %v990
      %v1028 = vpack.c.bf16 %v995, %v993
      %v1029 = vpack.c.bf16 %v996, %v994
      %s1030 = sld [smem:[#allocation2]]
      %v1031 = vstv %s1030
      %v1034 = vunpack.c.l.s4 1966171168
      %v1035 = vunpack.c.0.s8 %v1034
      %v1036 = vlaneseq
      %v1037 = vshrl.u32 %v1036, 7
      %v1038 = vsub.s32 %v1035, %v1037
      %v1039 = vrot.slane %v997, %v1038
      %v1040 = vcombine.high %v1039, %v1039
      %v1042 = vunpack.c.l.s4 1966171168
      %v1043 = vunpack.c.0.s8 %v1042
      %v1044 = vlaneseq
      %v1045 = vshrl.u32 %v1044, 7
      %v1046 = vsub.s32 %v1043, %v1045
      %v1047 = vrot.slane %v1039, %v1046
      %v1049 = vunpack.c.l.s4 1966171168
      %v1050 = vunpack.c.0.s8 %v1049
      %v1051 = vlaneseq
      %v1052 = vshrl.u32 %v1051, 7
      %v1053 = vsub.s32 %v1050, %v1052
      %v1054 = vrot.slane %v1040, %v1053
      %1057 = vmatprep.subr.bf16.mxu0 %v1013
      %1058 = vmatpush1.bf16.msra.mxu0 %v1012
      %1059 = vmatprep.subr.bf16.mxu0 %v1011
      %1060 = vmatpush1.bf16.msra.mxu0 %v1010
      %1061 = vmatprep.subr.bf16.mxu0 %v1009
      %1062 = vmatpush1.bf16.msra.mxu0 %v1008
      %1063 = vmatprep.subr.bf16.mxu0 %v1007
      %1064 = vmatpush1.bf16.msra.mxu0 %v1006
      %1065 = vmatprep.subr.bf16.mxu0 %v1005
      %1066 = vmatpush1.bf16.msra.mxu0 %v1004
      %1067 = vmatprep.subr.bf16.mxu0 %v1003
      %1068 = vmatpush1.bf16.msra.mxu0 %v1002
      %1069 = vmatprep.subr.bf16.mxu0 %v1001
      %1070 = vmatpush1.bf16.msra.mxu0 %v1000
      %1071 = vmatprep.subr.bf16.mxu0 %v999
      %1072 = vmatpush1.bf16.msra.mxu0 %v998
      %1073 = vmatprep.subr.bf16.mxu0 %v1029
      %1074 = vmatpush2.bf16.msra.mxu0 %v1028
      %1075 = vmatprep.subr.bf16.mxu0 %v1027
      %1076 = vmatpush2.bf16.msra.mxu0 %v1026
      %1077 = vmatprep.subr.bf16.mxu0 %v1025
      %1078 = vmatpush2.bf16.msra.mxu0 %v1024
      %1079 = vmatprep.subr.bf16.mxu0 %v1023
      %1080 = vmatpush2.bf16.msra.mxu0 %v1022
      %1081 = vmatprep.subr.bf16.mxu0 %v1021
      %1082 = vmatpush2.bf16.msra.mxu0 %v1020
      %1083 = vmatprep.subr.bf16.mxu0 %v1019
      %1084 = vmatpush2.bf16.msra.mxu0 %v1018
      %1085 = vmatprep.subr.bf16.mxu0 %v1017
      %1086 = vmatpush2.bf16.msra.mxu0 %v1016
      %1087 = vmatprep.subr.bf16.mxu0 %v1015
      %1088 = vmatpush2.bf16.msra.mxu0 %v1014
      %1089 = vmatprep.mubr.bf16.mxu0 %v1054
      %1090 = vmatmul.mubr.bf16.gmra.mxu0 %v1047
      %v1091 = vpop.f32.mrf.mxu0
      %v1092 = vadd.f32 %v1031, %v1091
      %v1093 = vpop.f32.mrf.mxu0
      %v1094 = vadd.f32 %v1031, %v1093
      %v1095 = vpop.f32.mrf.mxu0
      %v1096 = vpop.f32.mrf.mxu0
      %1097 = vdwg.mxu0
      %v1098 = vlaneseq
      %v1099 = vand.u32 %v1098, 127
      %v1100 = vadd.s32 %v1099, 128
      %s1101 = smul.u32 %s20, 256
      %v1102 = vstv %s1101
      %v1103 = vadd.s32 %v1099, %v1102
      %v1104 = vadd.s32 %v1100, %v1102
      %vm1105 = vcmp.lt.s32.totalorder %v1103, 600
      %vm1106 = vcmp.lt.s32.totalorder %v1104, 600
      %v1107 = vsel %vm1105, 1, 0
      %v1108 = vsel %vm1106, 1, 0
      %v1109 = vcvt.s32.f32 %v1107
      %v1110 = vcvt.s32.f32 %v1108
      %v1111 = vsel %vm1105, %v1092, 0.0
      %v1112 = vsel %vm1106, %v1094, 0.0
      %v1113 = vld [vmem:[%s334] sm:$0x3]
      %v1115 = vlaneseq
      %v1116 = vshrl.u32 %v1115, 7
      %v1117 = vsub.s32 0, %v1116
      %v1118 = vrot.slane %v1113, %v1117
      %v1119 = vlaneseq
      %v1120 = vshrl.u32 %v1119, 7
      %v1121 = vsub.s32 1, %v1120
      %v1122 = vrot.slane %v1113, %v1121
      %v1125 = vsel %vm1105, %v1118, 0.0
      %v1126 = vsel %vm1106, %v1122, 0.0
      %v1127 = vmax.f32 %v1111, 0.0
      %v1128 = vmax.f32 %v1112, 0.0
      %v1129 = vmul.f32 %v1111, %v1125
      %v1130 = vmul.f32 %v1112, %v1126
      %v1131 = vsub.f32 %v1127, %v1129
      %v1132 = vsub.f32 %v1128, %v1130
      %v1133 = vand.u32 2147483647, %v1111
      %v1134 = vand.u32 2147483647, %v1112
      %v1135 = vsub.f32 0.0, %v1133
      %v1136 = vsub.f32 0.0, %v1134
      %v1137 = vmul.f32 %v1135, 1.442695
      %v1138 = vpow.pop %v1137
      %v1139 = vmul.f32 %v1136, 1.442695
      %v1140 = vpow.pop %v1139
      %v1141 = vadd.f32 %v1138, 1.0
      %v1142 = vlog2.pop %v1141
      %v1143 = vmul.f32 %v1142, 0.6931472
      %v1144 = vmul.f32 -0.5, %v1138
      %v1145 = vadd.f32 %v1144, 1.0
      %v1146 = vmul.f32 %v1145, %v1138
      %v1147 = vand.u32 2147483647, %v1138
      %vm1148 = vcmp.lt.f32.partialorder %v1147, 0.0004427343
      %v1149 = vsel %vm1148, %v1146, %v1143
      %v1150 = vadd.f32 %v1140, 1.0
      %v1151 = vlog2.pop %v1150
      %v1152 = vmul.f32 %v1151, 0.6931472
      %v1153 = vmul.f32 -0.5, %v1140
      %v1154 = vadd.f32 %v1153, 1.0
      %v1155 = vmul.f32 %v1154, %v1140
      %v1156 = vand.u32 2147483647, %v1140
      %vm1157 = vcmp.lt.f32.partialorder %v1156, 0.0004427343
      %v1158 = vsel %vm1157, %v1155, %v1152
      %v1159 = vadd.f32 %v1131, %v1149
      %v1160 = vadd.f32 %v1132, %v1158
      %v1161 = vmul.f32 %v1159, %v1109
      %v1162 = vmul.f32 %v1160, %v1110
      %vm1163 = vcmp.ge.f32.partialorder %v1111, 0.0
      %vm1164 = vcmp.ge.f32.partialorder %v1112, 0.0
      %v1165 = vsel %vm1163, 1, 0
      %v1166 = vsel %vm1164, 1, 0
      %v1167 = vcvt.s32.f32 %v1165
      %v1168 = vcvt.s32.f32 %v1166
      %vm1169 = vcmp.eq.f32.partialorder %v1167, %v1125
      %vm1170 = vcmp.eq.f32.partialorder %v1168, %v1126
      %v1171 = vsel %vm1169, 1, 0
      %v1172 = vsel %vm1170, 1, 0
      %v1173 = vcvt.s32.f32 %v1171
      %v1174 = vcvt.s32.f32 %v1172
      %v1175 = vmul.f32 %v1173, %v1109
      %v1176 = vmul.f32 %v1174, %v1110
      %v1179 = vcombine.low %v1161, %v1162
      %v1182 = vunpack.c.l.s4 1935823168
      %v1183 = vunpack.c.0.s8 %v1182
      %v1184 = vlaneseq
      %v1185 = vshrl.u32 %v1184, 7
      %v1186 = vsub.s32 %v1183, %v1185
      %v1187 = vrot.slane %v1179, %v1186
      %vm1188 = vcmask 1041408
      %v1189 = vsel %vm1188, %v1187, 0.0
      %v1190 = vrot.slane %v1189, 4
      %v1191 = vadd.f32 %v1189, %v1190
      %v1192 = vrot.slane %v1191, 2
      %v1193 = vadd.f32 %v1191, %v1192
      %v1194 = vrot.slane %v1193, 1
      %v1195 = vadd.f32 %v1193, %v1194
      %1196 = vst [vmem:[%s342] sm:$0x1] %v1195
      %v1199 = vcombine.low %v1175, %v1176
      %v1202 = vunpack.c.l.s4 1935823168
      %v1203 = vunpack.c.0.s8 %v1202
      %v1204 = vlaneseq
      %v1205 = vshrl.u32 %v1204, 7
      %v1206 = vsub.s32 %v1203, %v1205
      %v1207 = vrot.slane %v1199, %v1206
      %v1208 = vsel %vm1188, %v1207, 0.0
      %v1209 = vrot.slane %v1208, 4
      %v1210 = vadd.f32 %v1208, %v1209
      %v1211 = vrot.slane %v1210, 2
      %v1212 = vadd.f32 %v1210, %v1211
      %v1213 = vrot.slane %v1212, 1
      %v1214 = vadd.f32 %v1212, %v1213
      %1215 = vst [vmem:[%s345] sm:$0x1] %v1214
      %p1216 = scmp.lt.s32.totalorder %s20, 2
      %s1217 = scalar_select %p1216, %s20, 2
      %s1218 = scalar_lea.vmem %s6, %s1217
      %p1219 = scmp.lt.s32.totalorder %s20, 2
      %s1220 = scalar_select %p1219, %s20, 2
      %s1221 = scalar_lea.vmem %s7, %s1220
      // Predicated region
      $region45: #{binary_domain_loss.1} parent=43 // pred_check
        %p1222 = pneg %p174
      $region46: #{binary_domain_loss.1} parent=43 // pred_check_branch
        %1224 = sbr.rel (%p1222) target = $region48
      $region47: #{binary_domain_loss.1} parent=43 // pred_region
        _
      $region48: #{binary_domain_loss.1} parent=43 // pred_fallthru
        _
      // Predicated region
      $region49: #{binary_domain_loss.1} parent=43 // pred_check
        %p1225 = pneg %p200
      $region50: #{binary_domain_loss.1} parent=43 // pred_check_branch
        %1227 = sbr.rel (%p1225) target = $region52
      $region51: #{binary_domain_loss.1} parent=43 // pred_region
        _
      $region52: #{binary_domain_loss.1} parent=43 // pred_fallthru
        _
    $region44: #{binary_domain_loss.1} parent=5 // pred_fallthru
      _
    %p1228 = scmp.le.s32.totalorder 2, %s15
    // Predicated region
    $region53: #{binary_domain_loss.1} parent=5 // pred_check
      %p1229 = pneg %p1228
    $region54: #{binary_domain_loss.1} parent=5 // pred_check_branch
      %1231 = sbr.rel (%p1229) target = $region56
    $region55: #{binary_domain_loss.1} parent=5 // pred_region
      %s1232 = ssub.s32 %s15, 2
      // Predicated region
      $region57: #{binary_domain_loss.1} parent=55 // pred_check
        %p1233 = pneg %p180
      $region58: #{binary_domain_loss.1} parent=55 // pred_check_branch
        %1235 = sbr.rel (%p1233) target = $region60
      $region59: #{binary_domain_loss.1} parent=55 // pred_region
        %p1236 = scmp.lt.s32.totalorder %s21, 2
        %s1237 = scalar_select %p1236, %s21, 2
        %s1238 = scalar_lea.vmem %s6, %s1237
      $region60: #{binary_domain_loss.1} parent=55 // pred_fallthru
        _
      // Predicated region
      $region61: #{binary_domain_loss.1} parent=55 // pred_check
        %p1239 = pneg %p206
      $region62: #{binary_domain_loss.1} parent=55 // pred_check_branch
        %1241 = sbr.rel (%p1239) target = $region64
      $region63: #{binary_domain_loss.1} parent=55 // pred_region
        %p1242 = scmp.lt.s32.totalorder %s21, 2
        %s1243 = scalar_select %p1242, %s21, 2
        %s1244 = scalar_lea.vmem %s7, %s1243
      $region64: #{binary_domain_loss.1} parent=55 // pred_fallthru
        _
    $region56: #{binary_domain_loss.1} parent=5 // pred_fallthru
      _
  $region6: #{binary_domain_loss.1} parent=0 // loop_footer
    %s19 = sadd.s32 1, %s15
  $region7: #{binary_domain_loss.1} parent=0 // loop_footer_branch
    %14 = sbr.rel target = $region3
  $region8: #{binary_domain_loss.1} parent=0 // loop_exit
    _

</llo_original>
